<compile_context>
chip_gen: v7x
topology: tpu7x:2x2x1
jax: 0.10.0
libtpu: 0.0.40
codegen_flags: <defaults>
</compile_context>

<pallas_src>
import math

import jax
import jax.numpy as jnp
from jax.experimental import pallas as pl
from jax.experimental.pallas import tpu as pltpu

_LOG_2PI = math.log(2.0 * math.pi)


# ---------------------------------------------------------------------------
# Small helpers
# ---------------------------------------------------------------------------
def _round_up(x: int, m: int) -> int:
    return ((x + m - 1) // m) * m


def _pick_batch_tile(rows_needed: int, row_bytes: int) -> int:
    """Rows per grid step: ~1 MiB per input block, multiple of 8, <= 512.

    Keeping blocks around 1 MiB keeps the double-buffered VMEM footprint far
    below the v7x scoped limit while still being big enough to hide per-step
    overhead (~0.35 us) and reach the HBM roofline on v5e/v6e/v7x.
    """
    tb = (1 << 20) // max(int(row_bytes), 1)
    tb = max(8, min(512, tb))
    tb -= tb % 8
    needed = max(8, _round_up(rows_needed, 8))
    return min(tb, needed)


# ---------------------------------------------------------------------------
# Kernels
# ---------------------------------------------------------------------------
def _log_prob_kernel(c_ref, mu_ref, isig_ref, x_ref, lp_ref):
    """Diagonal-Gaussian log prob for one (TB, Z) batch tile.

    c_ref    : (1,)  f32 in SMEM  -- hoisted constant  -sum(log sigma) - Z/2*log(2pi)
    mu_ref   : (1, Z) f32         -- resident across the grid
    isig_ref : (1, Z) f32         -- 1/sigma, resident across the grid
    x_ref    : (TB, Z)            -- input tile (any float dtype)
    lp_ref   : (1, TB) f32        -- lane-dense output row for this tile
    """
    x = x_ref[...].astype(jnp.float32)
    d = (x - mu_ref[...]) * isig_ref[...]            # (TB, Z)
    s = jnp.sum(d * d, axis=-1)                      # (TB,) lane reduction
    lp_ref[...] = (c_ref[0] - 0.5 * s)[None, :]      # lane-dense store


def _rsample_kernel(mu_ref, sigma_ref, eps_ref, z_ref):
    """Reparameterized sample z = mu + sigma * eps for one (TB, W) tile."""
    eps = eps_ref[...].astype(jnp.float32)
    z_ref[...] = (mu_ref[...] + sigma_ref[...] * eps).astype(z_ref.dtype)


# ---------------------------------------------------------------------------
# Wrappers around pallas_call
# ---------------------------------------------------------------------------
def _pallas_log_prob(mu, sigma, x):
    """x: (B, Z) -> log_prob: (B,) under Independent(Normal(mu, sigma), 1)."""
    B, Z = x.shape

    mu32 = mu.reshape(1, Z).astype(jnp.float32)
    sigma32 = sigma.reshape(1, Z).astype(jnp.float32)
    inv_sigma = 1.0 / sigma32
    # Hoisted scalar constant: -sum(log sigma) - 0.5 * Z * log(2*pi)
    const = (-jnp.sum(jnp.log(sigma32)) - 0.5 * Z * _LOG_2PI).reshape(1)

    itemsize = jnp.dtype(x.dtype).itemsize
    TB = _pick_batch_tile(B, Z * itemsize)
    B_pad = _round_up(B, TB)
    if B_pad != B:
        x = jnp.pad(x, ((0, B_pad - B), (0, 0)))
    num_tiles = B_pad // TB

    out = pl.pallas_call(
        _log_prob_kernel,
        out_shape=jax.ShapeDtypeStruct((num_tiles, TB), jnp.float32),
        grid=(num_tiles,),
        in_specs=[
            pl.BlockSpec(memory_space=pltpu.MemorySpace.SMEM),   # const scalar
            pl.BlockSpec((1, Z), lambda i: (0, 0)),              # mu (resident)
            pl.BlockSpec((1, Z), lambda i: (0, 0)),              # 1/sigma (resident)
            pl.BlockSpec((TB, Z), lambda i: (i, 0)),             # x tile
        ],
        out_specs=pl.BlockSpec((1, TB), lambda i: (i, 0)),       # lane-dense rows
        compiler_params=pltpu.CompilerParams(
            dimension_semantics=("parallel",)),
    )(const, mu32, inv_sigma, x)

    return out.reshape(-1)[:B]


def _pallas_rsample(mu, sigma, eps):
    """eps: (B, Z) -> z = mu + sigma * eps, shape (B, Z)."""
    B, Z = eps.shape
    out_dtype = eps.dtype
    itemsize = jnp.dtype(eps.dtype).itemsize

    mu32 = mu.reshape(1, Z).astype(jnp.float32)
    sig32 = sigma.reshape(1, Z).astype(jnp.float32)

    if Z < 128 and 128 % Z == 0:
        # Lane-dense flattening: pack 128//Z consecutive batch rows per
        # 128-lane row so every vld/vst uses full vregs.  mu/sigma are tiled
        # to match the repeating pattern along the 128 lanes.
        rows_per = 128 // Z
        R = -(-B // rows_per)                       # ceil(B / rows_per)
        TB = _pick_batch_tile(R, 128 * itemsize)
        R_pad = _round_up(R, TB)
        B_pad = R_pad * rows_per
        eps_w = jnp.pad(eps, ((0, B_pad - B), (0, 0))) if B_pad != B else eps
        eps_w = eps_w.reshape(R_pad, 128)           # free row-major reshape
        mu_w = jnp.tile(mu32, (1, rows_per))        # (1, 128)
        sig_w = jnp.tile(sig32, (1, rows_per))      # (1, 128)
        W, rows = 128, R_pad
    else:
        TB = _pick_batch_tile(B, Z * itemsize)
        B_pad = _round_up(B, TB)
        eps_w = jnp.pad(eps, ((0, B_pad - B), (0, 0))) if B_pad != B else eps
        mu_w, sig_w, W, rows = mu32, sig32, Z, B_pad

    num_tiles = rows // TB

    z = pl.pallas_call(
        _rsample_kernel,
        out_shape=jax.ShapeDtypeStruct((rows, W), out_dtype),
        grid=(num_tiles,),
        in_specs=[
            pl.BlockSpec((1, W), lambda i: (0, 0)),              # mu (resident)
            pl.BlockSpec((1, W), lambda i: (0, 0)),              # sigma (resident)
            pl.BlockSpec((TB, W), lambda i: (i, 0)),             # eps tile
        ],
        out_specs=pl.BlockSpec((TB, W), lambda i: (i, 0)),
        compiler_params=pltpu.CompilerParams(
            dimension_semantics=("parallel",)),
    )(mu_w, sig_w, eps_w)

    if W != Z:
        z = z.reshape(-1, Z)
    return z[:B]


# ---------------------------------------------------------------------------
# Module + distribution object (mirrors the torch API surface we need)
# ---------------------------------------------------------------------------
class IndependentGaussianDist:
    """Equivalent of Independent(Normal(mu, sigma), 1), backed by Pallas kernels."""

    def __init__(self, mu, sigma):
        self.mu = mu          # (z_dim,)
        self.sigma = sigma    # (z_dim,)

    @property
    def mean(self):
        return self.mu

    @property
    def stddev(self):
        return self.sigma

    def log_prob(self, x):
        # (B, z_dim) -> (B,) ;  (z_dim,) -> scalar   (torch Independent semantics)
        if x.ndim == 1:
            return _pallas_log_prob(self.mu, self.sigma, x[None, :])[0]
        return _pallas_log_prob(self.mu, self.sigma, x)

    def rsample(self, key, sample_shape=()):
        z_dim = self.mu.shape[0]
        if sample_shape == ():
            eps = jax.random.normal(key, (1, z_dim), jnp.float32)
            return _pallas_rsample(self.mu, self.sigma, eps)[0]
        (B,) = sample_shape
        eps = jax.random.normal(key, (B, z_dim), jnp.float32)
        return _pallas_rsample(self.mu, self.sigma, eps)


class IndependentGaussian:
    """JAX/Pallas port of the torch IndependentGaussian module."""

    def __init__(self, z_dim: int):
        # register_buffer('prior_mu', zeros); register_buffer('prior_sigma', ones)
        self.prior_mu = jnp.zeros((z_dim,), jnp.float32)
        self.prior_sigma = jnp.ones((z_dim,), jnp.float32)

    def forward(self) -> IndependentGaussianDist:
        return IndependentGaussianDist(self.prior_mu, self.prior_sigma)

    __call__ = forward


# ---------------------------------------------------------------------------
# Demo / self-test
# ---------------------------------------------------------------------------
if __name__ == "__main__":
    z_dim = 32
    batch = 8

    module = IndependentGaussian(z_dim)
    dist = module()  # forward()

    key = jax.random.PRNGKey(0)
    k_x, k_eps = jax.random.split(key)
    x = jax.random.normal(k_x, (batch, z_dim), jnp.float32)

    # Pallas log_prob (event-axis reduction inside the kernel).
    lp = jax.block_until_ready(dist.log_prob(x))

    # Pallas reparameterized sample (elementwise mu + sigma * eps in-kernel).
    z = jax.block_until_ready(dist.rsample(k_eps, sample_shape=(batch,)))

    # Pure-JAX reference checks (standard-normal prior).
    lp_ref = jnp.sum(-0.5 * x * x - 0.5 * _LOG_2PI, axis=-1)
    eps_ref = jax.random.normal(k_eps, (batch, z_dim), jnp.float32)

    assert lp.shape == (batch,)
    assert z.shape == (batch, z_dim)
    assert jnp.allclose(lp, lp_ref, atol=1e-5, rtol=1e-5), "log_prob mismatch"
    assert jnp.allclose(z, eps_ref, atol=1e-6), "rsample mismatch"

    print("KERNEL_OK")
</pallas_src>

<mosaic_0001>
module attributes {stable_mosaic.version = 11 : i64} {
  func.func @_log_prob_kernel(%arg0: i32, %arg1: memref<1xf32, #tpu.memory_space<smem>>, %arg2: memref<1x32xf32, #tpu.memory_space<vmem>>, %arg3: memref<1x32xf32, #tpu.memory_space<vmem>>, %arg4: memref<8x32xf32, #tpu.memory_space<vmem>>, %arg5: memref<1x8xf32, #tpu.memory_space<vmem>>) attributes {dimension_semantics = [#tpu.dimension_semantics<parallel>], iteration_bounds = array<i64: 1>, scalar_prefetch = 0 : i64, scratch_operands = 0 : i64, tpu.core_type = #tpu.core_type<tc>, window_params = [{transform_indices = @transform_0, window_bounds = array<i64: 1>}, {pipeline_mode = #tpu.pipeline_mode<synchronous>, transform_indices = @transform_1, window_bounds = array<i64: 1, 32>}, {pipeline_mode = #tpu.pipeline_mode<synchronous>, transform_indices = @transform_2, window_bounds = array<i64: 1, 32>}, {transform_indices = @transform_3, window_bounds = array<i64: 8, 32>}, {transform_indices = @transform_4, window_bounds = array<i64: 1, 8>}]} {
    %c0 = arith.constant 0 : index
    %c0_0 = arith.constant 0 : index
    %0 = vector.load %arg4[%c0, %c0_0] : memref<8x32xf32, #tpu.memory_space<vmem>>, vector<8x32xf32>
    %c0_1 = arith.constant 0 : index
    %c0_2 = arith.constant 0 : index
    %1 = vector.load %arg2[%c0_1, %c0_2] : memref<1x32xf32, #tpu.memory_space<vmem>>, vector<1x32xf32>
    %2 = vector.broadcast %1 : vector<1x32xf32> to vector<8x32xf32>
    %3 = arith.subf %0, %2 : vector<8x32xf32>
    %c0_3 = arith.constant 0 : index
    %c0_4 = arith.constant 0 : index
    %4 = vector.load %arg3[%c0_3, %c0_4] : memref<1x32xf32, #tpu.memory_space<vmem>>, vector<1x32xf32>
    %5 = vector.broadcast %4 : vector<1x32xf32> to vector<8x32xf32>
    %6 = arith.mulf %3, %5 : vector<8x32xf32>
    %7 = arith.mulf %6, %6 : vector<8x32xf32>
    %cst = arith.constant dense<0.000000e+00> : vector<8xf32>
    %8 = vector.multi_reduction <add>, %7, %cst [1] : vector<8x32xf32> to vector<8xf32>
    %c0_5 = arith.constant 0 : index
    %9 = memref.load %arg1[%c0_5] : memref<1xf32, #tpu.memory_space<smem>>
    %cst_6 = arith.constant 5.000000e-01 : f32
    %10 = vector.broadcast %cst_6 : f32 to vector<8xf32>
    %11 = arith.mulf %10, %8 : vector<8xf32>
    %12 = vector.broadcast %9 : f32 to vector<8xf32>
    %13 = arith.subf %12, %11 : vector<8xf32>
    %14 = vector.shape_cast %13 : vector<8xf32> to vector<1x8xf32>
    %c0_7 = arith.constant 0 : index
    %c0_8 = arith.constant 0 : index
    %15 = vector.load %arg5[%c0_7, %c0_8] : memref<1x8xf32, #tpu.memory_space<vmem>>, vector<1x8xf32>
    tpu.vector_store %arg5[%c0_7, %c0_8], %14 {strides = array<i32>} : memref<1x8xf32, #tpu.memory_space<vmem>>, vector<1x8xf32>,
    return
  }
  func.func @transform_0(%arg0: i32) -> i32 {
    %c0_i32 = arith.constant 0 : i32
    %c0_i32_0 = arith.constant 0 : i32
    return %c0_i32 : i32
  }
  func.func @transform_1(%arg0: i32) -> (i32, i32) {
    %c0_i32 = arith.constant 0 : i32
    %c0_i32_0 = arith.constant 0 : i32
    %c0_i32_1 = arith.constant 0 : i32
    return %c0_i32, %c0_i32_0 : i32, i32
  }
  func.func @transform_2(%arg0: i32) -> (i32, i32) {
    %c0_i32 = arith.constant 0 : i32
    %c0_i32_0 = arith.constant 0 : i32
    %c0_i32_1 = arith.constant 0 : i32
    return %c0_i32, %c0_i32_0 : i32, i32
  }
  func.func @transform_3(%arg0: i32) -> (i32, i32) {
    %c0_i32 = arith.constant 0 : i32
    %c0_i32_0 = arith.constant 0 : i32
    return %arg0, %c0_i32 : i32, i32
  }
  func.func @transform_4(%arg0: i32) -> (i32, i32) {
    %c0_i32 = arith.constant 0 : i32
    %c0_i32_0 = arith.constant 0 : i32
    return %arg0, %c0_i32 : i32, i32
  }
}

</mosaic_0001>

<llo_original>
// kernel: tpu_custom_call.1
$region0: #{tpu_custom_call.1}
  #allocation0 [shape = 'u32[]', space=smem, size = 0x4, offset = 0x4, fixed_abs, tag = 'smem constant byte address 0x4 - core index']
  #allocation1 [shape = 'u32[144,128]{1,0:T(1,128)}', space=vmem, size = 0x12000, scoped, tag = 'internal scratch']
  #allocation2 [shape = 'f32[1]{0:T(128)S(6)}', space=smem, size = 0x200, scoped, tag = 'scoped memory for tpu_custom_call.1']
  %s0 = inlined_call_operand.<no memory space> [shape: f32[1], index: 0, kind: input, shape index: {}]
  %s1 = inlined_call_operand.vmem [shape: f32[1,32], index: 1, kind: input, shape index: {}]
  %s2 = inlined_call_operand.vmem [shape: f32[1,32], index: 2, kind: input, shape index: {}]
  %s3 = inlined_call_operand.vmem [shape: f32[8,32], index: 3, kind: input, shape index: {}]
  %s4 = inlined_call_operand.hbm [shape: f32[1,8], index: 4, kind: output, shape index: {}]
  %s5 = sld [smem:[#allocation0]]
  $region26: #{tpu_custom_call.1} parent=0
    _
  %s7 = ssub.s32 1, %s5
  %s8 = scalar_select 0, %s7, %s5
  %9 = sst [smem:[#allocation2]] %s0
  $region1: #{tpu_custom_call.1} parent=0
    #allocation3 [shape = 'u8[512]{0}', space=vmem, size = 0x400, scoped, tag = 'output window, operand 0, single buffered']
    #allocation4 [shape = 's32[1]{0}', space=sflag, size = 0x4, scoped, tag = 'scoped memory for tpu_custom_call.1']
    %10 = vsyncpa [#allocation4], 0
    // Predicated region
    $region2: #{tpu_custom_call.1} parent=1 // pred_check
      _
    $region3: #{tpu_custom_call.1} parent=1 // pred_check_branch
      %12 = sbr.rel (0) target = $region5
    $region4: #{tpu_custom_call.1} parent=1 // pred_region
      _
    $region5: #{tpu_custom_call.1} parent=1 // pred_fallthru
      _
    // Predicated region
    $region6: #{tpu_custom_call.1} parent=1 // pred_check
      _
    $region7: #{tpu_custom_call.1} parent=1 // pred_check_branch
      %14 = sbr.rel (0) target = $region9
    $region8: #{tpu_custom_call.1} parent=1 // pred_region
      _
    $region9: #{tpu_custom_call.1} parent=1 // pred_fallthru
      _
    // Predicated region
    $region10: #{tpu_custom_call.1} parent=1 // pred_check
      _
    $region11: #{tpu_custom_call.1} parent=1 // pred_check_branch
      %16 = sbr.rel (0) target = $region13
    $region12: #{tpu_custom_call.1} parent=1 // pred_region
      _
    $region13: #{tpu_custom_call.1} parent=1 // pred_fallthru
      _
    // Predicated region
    $region14: #{tpu_custom_call.1} parent=1 // pred_check
      _
    $region15: #{tpu_custom_call.1} parent=1 // pred_check_branch
      %18 = sbr.rel (0) target = $region17
    $region16: #{tpu_custom_call.1} parent=1 // pred_region
      _
    $region17: #{tpu_custom_call.1} parent=1 // pred_fallthru
      _
    %v19 = vld [vmem:[%s3] sm:$0xff]
    %v20 = vld [vmem:[%s1] sm:$0x1]
    %v22 = vlaneseq
    %v23 = vshrl.u32 %v22, 7
    %v24 = vsub.s32 0, %v23
    %v25 = vrot.slane %v20, %v24
    %v27 = vsub.f32 %v19, %v25
    %v28 = vld [vmem:[%s2] sm:$0x1]
    %v30 = vlaneseq
    %v31 = vshrl.u32 %v30, 7
    %v32 = vsub.s32 0, %v31
    %v33 = vrot.slane %v28, %v32
    %v35 = vmul.f32 %v27, %v33
    %v36 = vmul.f32 %v35, %v35
    %vm37 = vcmask 261120
    %v38 = vsel %vm37, %v36, 0.0
    %39 = vadd.xlane.f32.xlu0 %v38
    %v40 = vpop.xlane.xlu0 %39
    %s41 = sld [smem:[#allocation2]]
    %v42 = vmul.f32 %v40, 0.5
    %v43 = vstv %s41
    %v44 = vsub.f32 %v43, %v42
    %v46 = vlaneseq
    %v47 = vand.u32 %v46, 127
    %v48 = vlaneseq
    %v49 = vshrl.u32 %v48, 7
    %v50 = vsub.s32 %v47, %v49
    %v51 = vrot.slane %v44, %v50
    %vm53 = vcmask 57344
    %54 = vst.msk [vmem:[#allocation3] sm:$0x1] %vm53, %v51
    // Predicated region
    $region18: #{tpu_custom_call.1} parent=1 // pred_check
      _
    $region19: #{tpu_custom_call.1} parent=1 // pred_check_branch
      %56 = sbr.rel (0) target = $region21
    $region20: #{tpu_custom_call.1} parent=1 // pred_region
      %s58 = ssub.s32 16, 16
      %59 = vsyncadd [#allocation4], %s58
      %s61 = sshll.u32 [#allocation3], 4
      %s62 = int_to_ptr.vmem [resolvable:$true] %s61
      %64 = dma.vmem_to_hbm [thread:$0]  %s62, 16, %s4, [#allocation4]
    $region21: #{tpu_custom_call.1} parent=1 // pred_fallthru
      _
    // Predicated region
    $region22: #{tpu_custom_call.1} parent=1 // pred_check
      _
    $region23: #{tpu_custom_call.1} parent=1 // pred_check_branch
      %66 = sbr.rel (0) target = $region25
    $region24: #{tpu_custom_call.1} parent=1 // pred_region
      %67 = dma.done [#allocation4], 16
    $region25: #{tpu_custom_call.1} parent=1 // pred_fallthru
      _
    %68 = vsyncpa [#allocation4], 1

</llo_original>
